<compile_context>
chip_gen: v5e
topology: v5e:2x2
jax: 0.10.0
libtpu: 0.0.40
codegen_flags: <defaults>
</compile_context>

<pallas_src>
import functools

import jax
import jax.numpy as jnp
from jax.experimental import pallas as pl
from jax.experimental.pallas import tpu as pltpu


def _highway_kernel(num_layers, H, x2_is_zero, *refs):
    """refs = (x1, [x2], w0_x1, [w0_x2], b0, [w_l, b_l]*(L-1), out).

    Weights are pre-fused (lin | gate) along the output dim -> shape (in, 2H);
    biases are pre-fused -> shape (1, 2H).
    """
    idx = 0
    x1_ref = refs[idx]
    idx += 1
    x2_ref = None
    if not x2_is_zero:
        x2_ref = refs[idx]
        idx += 1
    out_ref = refs[-1]
    w_refs = list(refs[idx:-1])

    mm_dtype = w_refs[0].dtype  # matmul operand dtype (f32 or bf16)

    # ---- layer 0: fused lin+gate matmul on the (virtual) concat([x1, x2]) ----
    w0_x1 = w_refs.pop(0)
    w0_x2 = None if x2_is_zero else w_refs.pop(0)
    b0 = w_refs.pop(0)

    z = jnp.dot(x1_ref[...].astype(mm_dtype), w0_x1[...],
                preferred_element_type=jnp.float32)
    if not x2_is_zero:
        x2 = x2_ref[...].astype(jnp.float32)
        z = z + jnp.dot(x2.astype(mm_dtype), w0_x2[...],
                        preferred_element_type=jnp.float32)
    z = z + b0[...]
    h = jnp.tanh(z[:, :H])
    t = jax.nn.sigmoid(z[:, H:])
    if x2_is_zero:
        s = h * t                      # x2 == 0  =>  h*t + 0*(1-t)
    else:
        s = x2 + t * (h - x2)          # == h*t + x2*(1-t)

    # ---- layers 1..L-1 (trace-time unroll; fine for small L) ----
    # TODO(synk): for large num_layers stack weights as [L, H, 2H] and loop
    # with lax.fori_loop(unroll=True) over a single stacked VMEM ref.
    for _ in range(1, num_layers):
        w = w_refs.pop(0)
        b = w_refs.pop(0)
        z = jnp.dot(s.astype(mm_dtype), w[...],
                    preferred_element_type=jnp.float32) + b[...]
        h = jnp.tanh(z[:, :H])
        t = jax.nn.sigmoid(z[:, H:])
        s = s + t * (h - s)            # == h*t + s*(1-t)

    out_ref[...] = s.astype(out_ref.dtype)


def _round_up(n, m):
    return ((n + m - 1) // m) * m


def highway_cell_forward(x1, x2, params, *, matmul_dtype=jnp.float32,
                         x2_is_zero=False, tile_b=512):
    """Pallas forward.

    params: list over layers of (W_lin, b_lin, W_gate, b_gate), weights stored
    (in_features, out_features).  Returns (s, s) matching the PyTorch module.
    """
    num_layers = len(params)
    B, H = x1.shape

    # --- fuse lin+gate weights; pre-split layer-0 rows in the wrapper ---
    wl0, bl0, wg0, bg0 = params[0]
    wf0 = jnp.concatenate([wl0, wg0], axis=1).astype(matmul_dtype)     # (2H, 2H)
    bf0 = jnp.concatenate([bl0, bg0]).reshape(1, 2 * H).astype(jnp.float32)
    weight_args = [wf0[:H, :]]
    if not x2_is_zero:
        weight_args.append(wf0[H:, :])
    weight_args.append(bf0)
    for layer in range(1, num_layers):
        wl, bl, wg, bg = params[layer]
        weight_args.append(jnp.concatenate([wl, wg], axis=1).astype(matmul_dtype))
        weight_args.append(
            jnp.concatenate([bl, bg]).reshape(1, 2 * H).astype(jnp.float32))

    # --- batch tiling (sublane-aligned); pad B up to a tile multiple ---
    tile_b = min(tile_b, _round_up(B, 8))
    Bp = _round_up(B, tile_b)
    x1p = x1 if Bp == B else jnp.pad(x1, ((0, Bp - B), (0, 0)))
    act_args = [x1p]
    if not x2_is_zero:
        x2p = x2 if Bp == B else jnp.pad(x2, ((0, Bp - B), (0, 0)))
        act_args.append(x2p)

    grid = (Bp // tile_b,)
    act_spec = pl.BlockSpec((tile_b, H), lambda i: (i, 0))
    # Constant block index -> weights stay resident in VMEM across grid steps.
    weight_specs = [pl.BlockSpec(a.shape, lambda i: (0, 0)) for a in weight_args]
    in_specs = [act_spec] * len(act_args) + weight_specs
    out_specs = pl.BlockSpec((tile_b, H), lambda i: (i, 0))

    # --- explicit VMEM budget: resident weights + double-buffered act tiles ---
    weight_bytes = sum(a.size * a.dtype.itemsize for a in weight_args)
    act_bytes = (len(act_args) + 1) * 2 * tile_b * H * 4        # dbl-buffered tiles
    scratch_bytes = 8 * tile_b * 2 * H * 4                      # in-kernel temps
    vmem_limit = int(min(
        64 << 20,  # safe on v7x's 64 MiB physical VMEM
        max(32 << 20, 2 * weight_bytes + act_bytes + scratch_bytes + (4 << 20))))

    kernel = functools.partial(_highway_kernel, num_layers, H, x2_is_zero)
    s = pl.pallas_call(
        kernel,
        out_shape=jax.ShapeDtypeStruct((Bp, H), x1.dtype),
        grid=grid,
        in_specs=in_specs,
        out_specs=out_specs,
        compiler_params=pltpu.CompilerParams(
            dimension_semantics=("parallel",),
            vmem_limit_bytes=vmem_limit),
    )(*act_args, *weight_args)
    if Bp != B:
        s = s[:B]
    return s, s


def _ref_forward(x1, x2, params):
    """Pure-JAX reference (mirrors the PyTorch code)."""
    cat = jnp.concatenate([x1, x2], axis=1)
    wl0, bl0, wg0, bg0 = params[0]
    h = jnp.tanh(cat @ wl0 + bl0)
    t = jax.nn.sigmoid(cat @ wg0 + bg0)
    s = h * t + x2 * (1.0 - t)
    for layer in range(1, len(params)):
        wl, bl, wg, bg = params[layer]
        h = jnp.tanh(s @ wl + bl)
        t = jax.nn.sigmoid(s @ wg + bg)
        s = h * t + s * (1.0 - t)
    return s, s


def init_params(key, hidden_size, num_layers):
    """nn.Linear-style init (uniform +/- 1/sqrt(fan_in)); weights stored (in, out)."""
    params = []
    for layer in range(num_layers):
        fan_in = hidden_size * 2 if layer == 0 else hidden_size
        bound = 1.0 / jnp.sqrt(float(fan_in))
        key, k1, k2, k3, k4 = jax.random.split(key, 5)
        wl = jax.random.uniform(k1, (fan_in, hidden_size), jnp.float32, -bound, bound)
        bl = jax.random.uniform(k2, (hidden_size,), jnp.float32, -bound, bound)
        wg = jax.random.uniform(k3, (fan_in, hidden_size), jnp.float32, -bound, bound)
        bg = jax.random.uniform(k4, (hidden_size,), jnp.float32, -bound, bound)
        params.append((wl, bl, wg, bg))
    return params


if __name__ == "__main__":
    batch = 8
    hidden_size = 32
    num_layers = 2

    key = jax.random.PRNGKey(0)
    key, kx1, kx2 = jax.random.split(key, 3)
    x1 = jax.random.normal(kx1, (batch, hidden_size), jnp.float32)
    x2 = jax.random.normal(kx2, (batch, hidden_size), jnp.float32)
    params = init_params(key, hidden_size, num_layers)

    # 1) General two-tensor path, f32 matmuls -> tight check vs reference.
    s_out, _ = highway_cell_forward(x1, x2, params)
    s_out = jax.block_until_ready(s_out)
    s_ref, _ = _ref_forward(x1, x2, params)
    assert jnp.allclose(s_out, s_ref, atol=1e-5, rtol=1e-5), "mismatch (f32, x2!=0)"

    # 2) The module's single-tensor call path (x2 == 0) using the fast path.
    zeros = jnp.zeros_like(x1)
    s_out0, _ = highway_cell_forward(x1, zeros, params, x2_is_zero=True)
    s_out0 = jax.block_until_ready(s_out0)
    s_ref0, _ = _ref_forward(x1, zeros, params)
    assert jnp.allclose(s_out0, s_ref0, atol=1e-5, rtol=1e-5), "mismatch (f32, x2==0)"

    # 3) bf16 MXU operands (f32 accumulation, f32 elementwise) -> looser check.
    s_bf16, _ = highway_cell_forward(x1, x2, params, matmul_dtype=jnp.bfloat16)
    s_bf16 = jax.block_until_ready(s_bf16)
    assert jnp.allclose(s_bf16, s_ref, atol=5e-2, rtol=5e-2), "mismatch (bf16)"

    print("KERNEL_OK")
</pallas_src>

<mosaic_0001>
module attributes {stable_mosaic.version = 11 : i64} {
  func.func @_highway_kernel(%arg0: i32, %arg1: memref<8x32xf32, #tpu.memory_space<vmem>>, %arg2: memref<8x32xf32, #tpu.memory_space<vmem>>, %arg3: memref<32x64xf32, #tpu.memory_space<vmem>>, %arg4: memref<32x64xf32, #tpu.memory_space<vmem>>, %arg5: memref<1x64xf32, #tpu.memory_space<vmem>>, %arg6: memref<32x64xf32, #tpu.memory_space<vmem>>, %arg7: memref<1x64xf32, #tpu.memory_space<vmem>>, %arg8: memref<8x32xf32, #tpu.memory_space<vmem>>) attributes {dimension_semantics = [#tpu.dimension_semantics<parallel>], iteration_bounds = array<i64: 1>, scalar_prefetch = 0 : i64, scratch_operands = 0 : i64, tpu.core_type = #tpu.core_type<tc>, window_params = [{transform_indices = @transform_0, window_bounds = array<i64: 8, 32>}, {transform_indices = @transform_1, window_bounds = array<i64: 8, 32>}, {pipeline_mode = #tpu.pipeline_mode<synchronous>, transform_indices = @transform_2, window_bounds = array<i64: 32, 64>}, {pipeline_mode = #tpu.pipeline_mode<synchronous>, transform_indices = @transform_3, window_bounds = array<i64: 32, 64>}, {pipeline_mode = #tpu.pipeline_mode<synchronous>, transform_indices = @transform_4, window_bounds = array<i64: 1, 64>}, {pipeline_mode = #tpu.pipeline_mode<synchronous>, transform_indices = @transform_5, window_bounds = array<i64: 32, 64>}, {pipeline_mode = #tpu.pipeline_mode<synchronous>, transform_indices = @transform_6, window_bounds = array<i64: 1, 64>}, {transform_indices = @transform_7, window_bounds = array<i64: 8, 32>}]} {
    %c0 = arith.constant 0 : index
    %c0_0 = arith.constant 0 : index
    %0 = vector.load %arg1[%c0, %c0_0] : memref<8x32xf32, #tpu.memory_space<vmem>>, vector<8x32xf32>
    %c0_1 = arith.constant 0 : index
    %c0_2 = arith.constant 0 : index
    %1 = vector.load %arg3[%c0_1, %c0_2] : memref<32x64xf32, #tpu.memory_space<vmem>>, vector<32x64xf32>
    %cst = arith.constant dense<0.000000e+00> : vector<8x64xf32>
    %2 = tpu.matmul %0, %1, %cst {dimension_numbers = #tpu.dot_dimension_numbers<[1], [0], [0], [1], [0, 0, 1, 1], [], []>} : vector<8x32xf32>, vector<32x64xf32>, vector<8x64xf32> -> vector<8x64xf32>
    %c0_3 = arith.constant 0 : index
    %c0_4 = arith.constant 0 : index
    %3 = vector.load %arg2[%c0_3, %c0_4] : memref<8x32xf32, #tpu.memory_space<vmem>>, vector<8x32xf32>
    %c0_5 = arith.constant 0 : index
    %c0_6 = arith.constant 0 : index
    %4 = vector.load %arg4[%c0_5, %c0_6] : memref<32x64xf32, #tpu.memory_space<vmem>>, vector<32x64xf32>
    %cst_7 = arith.constant dense<0.000000e+00> : vector<8x64xf32>
    %5 = tpu.matmul %3, %4, %cst_7 {dimension_numbers = #tpu.dot_dimension_numbers<[1], [0], [0], [1], [0, 0, 1, 1], [], []>} : vector<8x32xf32>, vector<32x64xf32>, vector<8x64xf32> -> vector<8x64xf32>
    %6 = arith.addf %2, %5 : vector<8x64xf32>
    %c0_8 = arith.constant 0 : index
    %c0_9 = arith.constant 0 : index
    %7 = vector.load %arg5[%c0_8, %c0_9] : memref<1x64xf32, #tpu.memory_space<vmem>>, vector<1x64xf32>
    %8 = vector.broadcast %7 : vector<1x64xf32> to vector<8x64xf32>
    %9 = arith.addf %6, %8 : vector<8x64xf32>
    %10 = vector.extract_strided_slice %9 {offsets = [0, 0], sizes = [8, 32], strides = [1, 1]} : vector<8x64xf32> to vector<8x32xf32>
    %11 = math.tanh %10 : vector<8x32xf32>
    %12 = vector.extract_strided_slice %9 {offsets = [0, 32], sizes = [8, 32], strides = [1, 1]} : vector<8x64xf32> to vector<8x32xf32>
    %13 = arith.negf %12 : vector<8x32xf32>
    %14 = math.exp %13 : vector<8x32xf32>
    %cst_10 = arith.constant 1.000000e+00 : f32
    %15 = vector.broadcast %cst_10 : f32 to vector<8x32xf32>
    %16 = arith.addf %15, %14 : vector<8x32xf32>
    %17 = arith.divf %15, %16 : vector<8x32xf32>
    %18 = arith.subf %11, %3 : vector<8x32xf32>
    %19 = arith.mulf %17, %18 : vector<8x32xf32>
    %20 = arith.addf %3, %19 : vector<8x32xf32>
    %c0_11 = arith.constant 0 : index
    %c0_12 = arith.constant 0 : index
    %21 = vector.load %arg6[%c0_11, %c0_12] : memref<32x64xf32, #tpu.memory_space<vmem>>, vector<32x64xf32>
    %cst_13 = arith.constant dense<0.000000e+00> : vector<8x64xf32>
    %22 = tpu.matmul %20, %21, %cst_13 {dimension_numbers = #tpu.dot_dimension_numbers<[1], [0], [0], [1], [0, 0, 1, 1], [], []>} : vector<8x32xf32>, vector<32x64xf32>, vector<8x64xf32> -> vector<8x64xf32>
    %c0_14 = arith.constant 0 : index
    %c0_15 = arith.constant 0 : index
    %23 = vector.load %arg7[%c0_14, %c0_15] : memref<1x64xf32, #tpu.memory_space<vmem>>, vector<1x64xf32>
    %24 = vector.broadcast %23 : vector<1x64xf32> to vector<8x64xf32>
    %25 = arith.addf %22, %24 : vector<8x64xf32>
    %26 = vector.extract_strided_slice %25 {offsets = [0, 0], sizes = [8, 32], strides = [1, 1]} : vector<8x64xf32> to vector<8x32xf32>
    %27 = math.tanh %26 : vector<8x32xf32>
    %28 = vector.extract_strided_slice %25 {offsets = [0, 32], sizes = [8, 32], strides = [1, 1]} : vector<8x64xf32> to vector<8x32xf32>
    %29 = arith.negf %28 : vector<8x32xf32>
    %30 = math.exp %29 : vector<8x32xf32>
    %cst_16 = arith.constant 1.000000e+00 : f32
    %31 = vector.broadcast %cst_16 : f32 to vector<8x32xf32>
    %32 = arith.addf %31, %30 : vector<8x32xf32>
    %33 = arith.divf %31, %32 : vector<8x32xf32>
    %34 = arith.subf %27, %20 : vector<8x32xf32>
    %35 = arith.mulf %33, %34 : vector<8x32xf32>
    %36 = arith.addf %20, %35 : vector<8x32xf32>
    %c0_17 = arith.constant 0 : index
    %c0_18 = arith.constant 0 : index
    %37 = vector.load %arg8[%c0_17, %c0_18] : memref<8x32xf32, #tpu.memory_space<vmem>>, vector<8x32xf32>
    tpu.vector_store %arg8[%c0_17, %c0_18], %36 {strides = array<i32>} : memref<8x32xf32, #tpu.memory_space<vmem>>, vector<8x32xf32>,
    return
  }
  func.func @transform_0(%arg0: i32) -> (i32, i32) {
    %c0_i32 = arith.constant 0 : i32
    %c0_i32_0 = arith.constant 0 : i32
    return %arg0, %c0_i32 : i32, i32
  }
  func.func @transform_1(%arg0: i32) -> (i32, i32) {
    %c0_i32 = arith.constant 0 : i32
    %c0_i32_0 = arith.constant 0 : i32
    return %arg0, %c0_i32 : i32, i32
  }
  func.func @transform_2(%arg0: i32) -> (i32, i32) {
    %c0_i32 = arith.constant 0 : i32
    %c0_i32_0 = arith.constant 0 : i32
    %c0_i32_1 = arith.constant 0 : i32
    return %c0_i32, %c0_i32_0 : i32, i32
  }
  func.func @transform_3(%arg0: i32) -> (i32, i32) {
    %c0_i32 = arith.constant 0 : i32
    %c0_i32_0 = arith.constant 0 : i32
    %c0_i32_1 = arith.constant 0 : i32
    return %c0_i32, %c0_i32_0 : i32, i32
  }
  func.func @transform_4(%arg0: i32) -> (i32, i32) {
    %c0_i32 = arith.constant 0 : i32
    %c0_i32_0 = arith.constant 0 : i32
    %c0_i32_1 = arith.constant 0 : i32
    return %c0_i32, %c0_i32_0 : i32, i32
  }
  func.func @transform_5(%arg0: i32) -> (i32, i32) {
    %c0_i32 = arith.constant 0 : i32
    %c0_i32_0 = arith.constant 0 : i32
    %c0_i32_1 = arith.constant 0 : i32
    return %c0_i32, %c0_i32_0 : i32, i32
  }
  func.func @transform_6(%arg0: i32) -> (i32, i32) {
    %c0_i32 = arith.constant 0 : i32
    %c0_i32_0 = arith.constant 0 : i32
    %c0_i32_1 = arith.constant 0 : i32
    return %c0_i32, %c0_i32_0 : i32, i32
  }
  func.func @transform_7(%arg0: i32) -> (i32, i32) {
    %c0_i32 = arith.constant 0 : i32
    %c0_i32_0 = arith.constant 0 : i32
    return %arg0, %c0_i32 : i32, i32
  }
}

</mosaic_0001>

<llo_original>
// kernel: tpu_custom_call.1
$region0: #{tpu_custom_call.1}
  #allocation0 [shape = 'u32[]', space=smem, size = 0x4, offset = 0x4, fixed_abs, tag = 'smem constant byte address 0x4 - core index']
  #allocation1 [shape = 'u32[72,128]{1,0:T(1,128)}', space=vmem, size = 0x9000, scoped, tag = 'internal scratch']
  %s0 = inlined_call_operand.hbm [shape: f32[8,32], index: 0, kind: input, shape index: {}]
  %s1 = inlined_call_operand.hbm [shape: f32[8,32], index: 1, kind: input, shape index: {}]
  %s2 = inlined_call_operand.hbm [shape: f32[32,64], index: 2, kind: input, shape index: {}]
  %s3 = inlined_call_operand.hbm [shape: f32[32,64], index: 3, kind: input, shape index: {}]
  %s4 = inlined_call_operand.vmem [shape: f32[1,64], index: 4, kind: input, shape index: {}]
  %s5 = inlined_call_operand.hbm [shape: f32[32,64], index: 5, kind: input, shape index: {}]
  %s6 = inlined_call_operand.vmem [shape: f32[1,64], index: 6, kind: input, shape index: {}]
  %s7 = inlined_call_operand.hbm [shape: f32[8,32], index: 7, kind: output, shape index: {}]
  %s8 = sld [smem:[#allocation0]]
  $region58: #{tpu_custom_call.1} parent=0
    _
  %s10 = ssub.s32 1, %s8
  %s11 = scalar_select 0, %s10, %s8
  $region1: #{tpu_custom_call.1} parent=0
    #allocation2 [shape = 'u8[4096]{0}', space=vmem, size = 0x1000, scoped, tag = 'input window, operand 0, single buffered']
    #allocation3 [shape = 's32[1]{0}', space=sflag, size = 0x4, scoped, tag = 'scoped memory for tpu_custom_call.1']
    #allocation4 [shape = 's32[1]{0}', space=sflag, size = 0x4, scoped, tag = 'scoped memory for tpu_custom_call.1']
    #allocation5 [shape = 'u8[4096]{0}', space=vmem, size = 0x1000, scoped, tag = 'input window, operand 1, single buffered']
    #allocation6 [shape = 's32[1]{0}', space=sflag, size = 0x4, scoped, tag = 'scoped memory for tpu_custom_call.1']
    #allocation7 [shape = 'u8[16384]{0}', space=vmem, size = 0x4000, scoped, tag = 'input window, operand 2, single buffered']
    #allocation8 [shape = 'u8[16384]{0}', space=vmem, size = 0x4000, scoped, tag = 'input window, operand 3, single buffered']
    #allocation9 [shape = 's32[1]{0}', space=sflag, size = 0x4, scoped, tag = 'scoped memory for tpu_custom_call.1']
    #allocation10 [shape = 'u8[16384]{0}', space=vmem, size = 0x4000, scoped, tag = 'input window, operand 5, single buffered']
    #allocation11 [shape = 'u8[4096]{0}', space=vmem, size = 0x1000, scoped, tag = 'output window, operand 0, single buffered']
    %12 = vsyncpa [#allocation3], 0
    %13 = vsyncpa [#allocation6], 0
    %14 = vsyncpa [#allocation9], 0
    %15 = vsyncpa [#allocation4], 0
    // Predicated region
    $region2: #{tpu_custom_call.1} parent=1 // pred_check
      _
    $region3: #{tpu_custom_call.1} parent=1 // pred_check_branch
      %17 = sbr.rel (0) target = $region5
    $region4: #{tpu_custom_call.1} parent=1 // pred_region
      %19 = vsyncadd [#allocation3], 0
      %s21 = sshll.u32 %s0, 4
      %s22 = int_to_ptr.hbm [resolvable:$true] %s21
      %s23 = sshll.u32 [#allocation2], 4
      %s24 = int_to_ptr.vmem [resolvable:$true] %s23
      %26 = dma.hbm_to_vmem [thread:$0]  %s22, 128, %s24, [#allocation3]
    $region5: #{tpu_custom_call.1} parent=1 // pred_fallthru
      _
    // Predicated region
    $region6: #{tpu_custom_call.1} parent=1 // pred_check
      _
    $region7: #{tpu_custom_call.1} parent=1 // pred_check_branch
      %28 = sbr.rel (0) target = $region9
    $region8: #{tpu_custom_call.1} parent=1 // pred_region
      %30 = vsyncadd [#allocation6], 0
      %s32 = sshll.u32 %s1, 4
      %s33 = int_to_ptr.hbm [resolvable:$true] %s32
      %s34 = sshll.u32 [#allocation5], 4
      %s35 = int_to_ptr.vmem [resolvable:$true] %s34
      %37 = dma.hbm_to_vmem [thread:$0]  %s33, 128, %s35, [#allocation6]
    $region9: #{tpu_custom_call.1} parent=1 // pred_fallthru
      _
    // Predicated region
    $region10: #{tpu_custom_call.1} parent=1 // pred_check
      _
    $region11: #{tpu_custom_call.1} parent=1 // pred_check_branch
      %39 = sbr.rel (0) target = $region13
    $region12: #{tpu_custom_call.1} parent=1 // pred_region
      %41 = vsyncadd [#allocation6], 0
      %s42 = sshll.u32 %s2, 4
      %s43 = int_to_ptr.hbm [resolvable:$true] %s42
      %s44 = sshll.u32 [#allocation7], 4
      %s45 = int_to_ptr.vmem [resolvable:$true] %s44
      %50 = dma.hbm_to_vmem [thread:$0]  %s43, 512, %s45, [#allocation6], 128, 128, 8
    $region13: #{tpu_custom_call.1} parent=1 // pred_fallthru
      _
    // Predicated region
    $region14: #{tpu_custom_call.1} parent=1 // pred_check
      _
    $region15: #{tpu_custom_call.1} parent=1 // pred_check_branch
      %52 = sbr.rel (0) target = $region17
    $region16: #{tpu_custom_call.1} parent=1 // pred_region
      %54 = vsyncadd [#allocation9], 0
      %s55 = sshll.u32 %s3, 4
      %s56 = int_to_ptr.hbm [resolvable:$true] %s55
      %s57 = sshll.u32 [#allocation8], 4
      %s58 = int_to_ptr.vmem [resolvable:$true] %s57
      %63 = dma.hbm_to_vmem [thread:$0]  %s56, 512, %s58, [#allocation9], 128, 128, 8
    $region17: #{tpu_custom_call.1} parent=1 // pred_fallthru
      _
    // Predicated region
    $region18: #{tpu_custom_call.1} parent=1 // pred_check
      _
    $region19: #{tpu_custom_call.1} parent=1 // pred_check_branch
      %65 = sbr.rel (0) target = $region21
    $region20: #{tpu_custom_call.1} parent=1 // pred_region
      _
    $region21: #{tpu_custom_call.1} parent=1 // pred_fallthru
      _
    // Predicated region
    $region22: #{tpu_custom_call.1} parent=1 // pred_check
      _
    $region23: #{tpu_custom_call.1} parent=1 // pred_check_branch
      %67 = sbr.rel (0) target = $region25
    $region24: #{tpu_custom_call.1} parent=1 // pred_region
      %69 = vsyncadd [#allocation9], 0
      %s70 = sshll.u32 %s5, 4
      %s71 = int_to_ptr.hbm [resolvable:$true] %s70
      %s72 = sshll.u32 [#allocation10], 4
      %s73 = int_to_ptr.vmem [resolvable:$true] %s72
      %78 = dma.hbm_to_vmem [thread:$0]  %s71, 512, %s73, [#allocation9], 128, 128, 8
    $region25: #{tpu_custom_call.1} parent=1 // pred_fallthru
      _
    // Predicated region
    $region26: #{tpu_custom_call.1} parent=1 // pred_check
      _
    $region27: #{tpu_custom_call.1} parent=1 // pred_check_branch
      %80 = sbr.rel (0) target = $region29
    $region28: #{tpu_custom_call.1} parent=1 // pred_region
      _
    $region29: #{tpu_custom_call.1} parent=1 // pred_fallthru
      _
    // Predicated region
    $region30: #{tpu_custom_call.1} parent=1 // pred_check
      _
    $region31: #{tpu_custom_call.1} parent=1 // pred_check_branch
      %82 = sbr.rel (0) target = $region33
    $region32: #{tpu_custom_call.1} parent=1 // pred_region
      %84 = dma.done [#allocation3], 128
    $region33: #{tpu_custom_call.1} parent=1 // pred_fallthru
      _
    // Predicated region
    $region34: #{tpu_custom_call.1} parent=1 // pred_check
      _
    $region35: #{tpu_custom_call.1} parent=1 // pred_check_branch
      %86 = sbr.rel (0) target = $region37
    $region36: #{tpu_custom_call.1} parent=1 // pred_region
      %88 = dma.done [#allocation6], 128
    $region37: #{tpu_custom_call.1} parent=1 // pred_fallthru
      _
    // Predicated region
    $region38: #{tpu_custom_call.1} parent=1 // pred_check
      _
    $region39: #{tpu_custom_call.1} parent=1 // pred_check_branch
      %90 = sbr.rel (0) target = $region41
    $region40: #{tpu_custom_call.1} parent=1 // pred_region
      %92 = dma.done [#allocation6], 512
    $region41: #{tpu_custom_call.1} parent=1 // pred_fallthru
      _
    // Predicated region
    $region42: #{tpu_custom_call.1} parent=1 // pred_check
      _
    $region43: #{tpu_custom_call.1} parent=1 // pred_check_branch
      %94 = sbr.rel (0) target = $region45
    $region44: #{tpu_custom_call.1} parent=1 // pred_region
      %96 = dma.done [#allocation9], 512
    $region45: #{tpu_custom_call.1} parent=1 // pred_fallthru
      _
    // Predicated region
    $region46: #{tpu_custom_call.1} parent=1 // pred_check
      _
    $region47: #{tpu_custom_call.1} parent=1 // pred_check_branch
      %98 = sbr.rel (0) target = $region49
    $region48: #{tpu_custom_call.1} parent=1 // pred_region
      %100 = dma.done [#allocation9], 512
    $region49: #{tpu_custom_call.1} parent=1 // pred_fallthru
      _
    %v101 = vld [vmem:[#allocation2] sm:$0xff]
    %v102 = vld [vmem:[#allocation7] sm:$0xff]
    %v103 = vld [vmem:[#allocation7 + $0x8] sm:$0xff]
    %v104 = vld [vmem:[#allocation7 + $0x10] sm:$0xff]
    %v105 = vld [vmem:[#allocation7 + $0x18] sm:$0xff]
    %v106 = vld [vmem:[#allocation5] sm:$0xff]
    %v107 = vld [vmem:[#allocation8] sm:$0xff]
    %v108 = vld [vmem:[#allocation8 + $0x8] sm:$0xff]
    %v109 = vld [vmem:[#allocation8 + $0x10] sm:$0xff]
    %v110 = vld [vmem:[#allocation8 + $0x18] sm:$0xff]
    %vm111 = vcmask 261120
    %v113 = vsel %vm111, %v106, 0
    %115 = vmatpush.msra.mxu0 0.0
    %116 = vmatpush.msra.mxu0 0.0
    %117 = vmatpush.msra.mxu0 0.0
    %118 = vmatpush.msra.mxu0 0.0
    %119 = vmatpush.msra.mxu0 0.0
    %120 = vmatpush.msra.mxu0 0.0
    %121 = vmatpush.msra.mxu0 0.0
    %122 = vmatpush.msra.mxu0 0.0
    %123 = vmatpush.msra.mxu0 0.0
    %124 = vmatpush.msra.mxu0 0.0
    %125 = vmatpush.msra.mxu0 0.0
    %126 = vmatpush.msra.mxu0 0.0
    %127 = vmatpush.msra.mxu0 %v110
    %128 = vmatpush.msra.mxu0 %v109
    %129 = vmatpush.msra.mxu0 %v108
    %130 = vmatpush.msra.mxu0 %v107
    %131 = vmatmul.f32.gmra.mxu0 %v113
    %v132 = vpop.f32.mrf.mxu0
    %v133 = vadd.f32 0.0, %v132
    %134 = vdwg.mxu0
    %v136 = vsel %vm111, %v101, 0
    %138 = vmatpush.msra.mxu0 0.0
    %139 = vmatpush.msra.mxu0 0.0
    %140 = vmatpush.msra.mxu0 0.0
    %141 = vmatpush.msra.mxu0 0.0
    %142 = vmatpush.msra.mxu0 0.0
    %143 = vmatpush.msra.mxu0 0.0
    %144 = vmatpush.msra.mxu0 0.0
    %145 = vmatpush.msra.mxu0 0.0
    %146 = vmatpush.msra.mxu0 0.0
    %147 = vmatpush.msra.mxu0 0.0
    %148 = vmatpush.msra.mxu0 0.0
    %149 = vmatpush.msra.mxu0 0.0
    %150 = vmatpush.msra.mxu0 %v105
    %151 = vmatpush.msra.mxu0 %v104
    %152 = vmatpush.msra.mxu0 %v103
    %153 = vmatpush.msra.mxu0 %v102
    %154 = vmatmul.f32.gmra.mxu0 %v136
    %v155 = vpop.f32.mrf.mxu0
    %v156 = vadd.f32 %v133, %v155
    %157 = vdwg.mxu0
    %v158 = vld [vmem:[%s4] sm:$0x1]
    %v160 = vperm.slane %v158, 0
    %v162 = vadd.f32 %v156, %v160
    %v163 = vtanh.pop %v162
    %v164 = vxor.u32 %v162, 2147483648
    %v165 = vmul.f32 %v164, 1.442695
    %v166 = vpow.pop %v165
    %v167 = vadd.f32 %v166, 1.0
    %v168 = vrcp.pop %v167
    %v169 = vmul.f32 %v167, %v168
    %v170 = vsub.f32 1.0, %v169
    %v171 = vmul.f32 %v168, %v170
    %v172 = vadd.f32 %v168, %v171
    %vm173 = vweird.f32 %v167
    %vm174 = vweird.f32 %v168
    %vm175 = vmor %vm173, %vm174
    %v176 = vsel %vm175, %v168, %v172
    %v177 = vand.u32 2147483647, %v167
    %vm178 = vcmp.eq.f32.partialorder %v177, 8.507059e+37
    %v179 = vand.u32 %v167, 2147483648
    %v180 = vor.u32 1.1754944e-38, %v179
    %v181 = vsel %vm178, %v180, %v176
    %v182 = vmul.f32 1.0, %v181
    %v183 = vsub.f32 %v163, %v106
    %185 = vrot.lane.b32.xlu0 %v183, 32
    %v186 = vpop.permute.xlu0 %185
    %v188 = vmul.f32 %v182, %v186
    %190 = vrot.lane.b32.xlu0 %v188, 96
    %v191 = vpop.permute.xlu0 %190
    %v193 = vadd.f32 %v106, %v191
    %v194 = vld [vmem:[#allocation10] sm:$0xff]
    %v195 = vld [vmem:[#allocation10 + $0x8] sm:$0xff]
    %v196 = vld [vmem:[#allocation10 + $0x10] sm:$0xff]
    %v197 = vld [vmem:[#allocation10 + $0x18] sm:$0xff]
    %v198 = vld [vmem:[%s6] sm:$0x1]
    %v200 = vperm.slane %v198, 0
    %v203 = vsel %vm111, %v193, 0
    %205 = vmatpush.msra.mxu0 0.0
    %206 = vmatpush.msra.mxu0 0.0
    %207 = vmatpush.msra.mxu0 0.0
    %208 = vmatpush.msra.mxu0 0.0
    %209 = vmatpush.msra.mxu0 0.0
    %210 = vmatpush.msra.mxu0 0.0
    %211 = vmatpush.msra.mxu0 0.0
    %212 = vmatpush.msra.mxu0 0.0
    %213 = vmatpush.msra.mxu0 0.0
    %214 = vmatpush.msra.mxu0 0.0
    %215 = vmatpush.msra.mxu0 0.0
    %216 = vmatpush.msra.mxu0 0.0
    %217 = vmatpush.msra.mxu0 %v197
    %218 = vmatpush.msra.mxu0 %v196
    %219 = vmatpush.msra.mxu0 %v195
    %220 = vmatpush.msra.mxu0 %v194
    %221 = vmatmul.f32.gmra.mxu0 %v203
    %v222 = vpop.f32.mrf.mxu0
    %v223 = vadd.f32 %v200, %v222
    %224 = vdwg.mxu0
    %v225 = vtanh.pop %v223
    %v226 = vxor.u32 %v223, 2147483648
    %v227 = vmul.f32 %v226, 1.442695
    %v228 = vpow.pop %v227
    %v229 = vadd.f32 %v228, 1.0
    %v230 = vrcp.pop %v229
    %v231 = vmul.f32 %v229, %v230
    %v232 = vsub.f32 1.0, %v231
    %v233 = vmul.f32 %v230, %v232
    %v234 = vadd.f32 %v230, %v233
    %vm235 = vweird.f32 %v229
    %vm236 = vweird.f32 %v230
    %vm237 = vmor %vm235, %vm236
    %v238 = vsel %vm237, %v230, %v234
    %v239 = vand.u32 2147483647, %v229
    %vm240 = vcmp.eq.f32.partialorder %v239, 8.507059e+37
    %v241 = vand.u32 %v229, 2147483648
    %v242 = vor.u32 1.1754944e-38, %v241
    %v243 = vsel %vm240, %v242, %v238
    %v244 = vmul.f32 1.0, %v243
    %v245 = vsub.f32 %v225, %v193
    %247 = vrot.lane.b32.xlu0 %v245, 32
    %v248 = vpop.permute.xlu0 %247
    %v250 = vmul.f32 %v244, %v248
    %252 = vrot.lane.b32.xlu0 %v250, 96
    %v253 = vpop.permute.xlu0 %252
    %v255 = vadd.f32 %v193, %v253
    %256 = vst.msk [vmem:[#allocation11] sm:$0xff] %vm111, %v255
    // Predicated region
    $region50: #{tpu_custom_call.1} parent=1 // pred_check
      _
    $region51: #{tpu_custom_call.1} parent=1 // pred_check_branch
      %258 = sbr.rel (0) target = $region53
    $region52: #{tpu_custom_call.1} parent=1 // pred_region
      %260 = vsyncadd [#allocation4], 0
      %s262 = sshll.u32 [#allocation11], 4
      %s263 = int_to_ptr.vmem [resolvable:$true] %s262
      %s264 = sshll.u32 %s7, 4
      %s265 = int_to_ptr.hbm [resolvable:$true] %s264
      %267 = dma.vmem_to_hbm [thread:$0]  %s263, 128, %s265, [#allocation4]
    $region53: #{tpu_custom_call.1} parent=1 // pred_fallthru
      _
    // Predicated region
    $region54: #{tpu_custom_call.1} parent=1 // pred_check
      _
    $region55: #{tpu_custom_call.1} parent=1 // pred_check_branch
      %269 = sbr.rel (0) target = $region57
    $region56: #{tpu_custom_call.1} parent=1 // pred_region
      %271 = dma.done [#allocation4], 128
    $region57: #{tpu_custom_call.1} parent=1 // pred_fallthru
      _
    %272 = vsyncpa [#allocation3], 1
    %273 = vsyncpa [#allocation6], 1
    %274 = vsyncpa [#allocation9], 1
    %275 = vsyncpa [#allocation4], 1

</llo_original>
